<compile_context>
chip_gen: v5e
topology: v5e:2x2
jax: 0.10.0
libtpu: 0.0.40
codegen_flags: <defaults>
</compile_context>

<pallas_src>
import jax
import jax.numpy as jnp
from jax import lax
from jax.experimental import pallas as pl
from jax.experimental.pallas import tpu as pltpu

EPS = 1e-5


def _output_kernel(x2_ref, w1a_ref, w1b_ref, b1a_ref, b1b_ref,
                   gamma_ref, beta_ref, w2_ref, b2_ref, w3_ref, b3_ref,
                   out_ref):
    tb = x2_ref.shape[0]
    C, n = gamma_ref.shape
    inv_cn = 1.0 / float(C * n)

    # Grid-invariant operands: loaded once per grid step and reused by every
    # batch of the unrolled loop (no broadcast_to, no repeated MXU weight push).
    w1a = w1a_ref[...]          # (C, C*T)  GLU "value" half, residual folded in
    w1b = w1b_ref[...]          # (C, C*T)  GLU "gate" half
    b1a = b1a_ref[...]          # (C, 1)
    b1b = b1b_ref[...]          # (C, 1)
    gamma = gamma_ref[...]      # (C, n)
    beta = beta_ref[...]        # (C, n)
    w2 = w2_ref[...]            # (C, C)
    b2 = b2_ref[...]            # (C, 1)
    w3 = w3_ref[...]            # (d_out, C)
    b3 = b3_ref[...]            # (d_out, 1)

    def body(b, carry):
        xb = x2_ref[b]                                                    # (C*T, n)

        # ---- tcl1: full-temporal (T,1) conv + GLU --------------------------
        # (w1a already contains the +x[:, :, T-1, :] residual via a selection
        #  matrix added in the wrapper, so a single matmul does conv+residual.)
        ya = jnp.dot(w1a, xb, preferred_element_type=jnp.float32) + b1a   # (C, n)
        yg = jnp.dot(w1b, xb, preferred_element_type=jnp.float32) + b1b   # (C, n)
        glu = ya * jax.nn.sigmoid(yg)                                     # (C, n)

        # ---- LayerNorm over (n, C) jointly, single-pass stats --------------
        s = jnp.sum(glu)
        ss = jnp.sum(glu * glu)
        mu = s * inv_cn
        var = ss * inv_cn - mu * mu
        normed = (glu - mu) * lax.rsqrt(var + EPS) * gamma + beta         # (C, n)

        # ---- tcl2: 1x1 conv + sigmoid, then fcon: 1x1 conv C -> d_out ------
        z = jax.nn.sigmoid(
            jnp.dot(w2, normed, preferred_element_type=jnp.float32) + b2)  # (C, n)
        out = jnp.dot(w3, z, preferred_element_type=jnp.float32) + b3      # (d_out, n)
        out_ref[b] = out.astype(out_ref.dtype)
        return carry

    # Short fixed trip-count -> bounded unroll for LLO scheduler visibility.
    lax.fori_loop(0, tb, body, 0, unroll=min(tb, 8))


def _choose_tb(B, C, T, n, itemsize, target_block_bytes):
    """Largest divisor of B whose x-block stays within the byte budget,
    preferring a grid length >= 2 so both v7x TensorCores get work."""
    row_bytes = max(1, itemsize * C * T * n)
    cap = max(1, target_block_bytes // row_bytes)
    divisors = [d for d in range(1, B + 1) if B % d == 0]
    preferred = [d for d in divisors if d <= cap and B // d >= 2]
    if preferred:
        return max(preferred)
    fallback = [d for d in divisors if d <= cap]
    return max(fallback) if fallback else 1


def output_forward(x, params, *, target_block_bytes=2 << 20, use_bf16_inputs=False):
    """x: (B, C, T, n) float32.  Returns (B, d_out, 1, n) like the PyTorch module."""
    B, C, T, n = x.shape
    w1 = params["w_tconv"]        # (2C, C, T, 1)
    b1 = params["b_tconv"]        # (2C,)
    gamma = params["gamma"]       # (n, C)
    beta = params["beta"]         # (n, C)
    w2 = params["w_tcl2"]         # (C, C, 1, 1)
    b2 = params["b_tcl2"]         # (C,)
    w3 = params["w_fcon"]         # (d_out, C, 1, 1)
    b3 = params["b_fcon"]         # (d_out,)
    d_out = w3.shape[0]

    # ---- operand prep: x is only reshaped; all other prep is weight-sized ---
    x2 = x.reshape(B, C * T, n)                  # merge contiguous (C, T) axes

    w1m = w1.reshape(2 * C, C * T)               # natural flatten of (c, t)
    # Fold the GLU residual x[:, :, T-1, :] into the "value" half of the weight:
    # row c of the residual is row c*T + (T-1) of the flattened (C*T) axis, so
    # (w1a + S) @ x_flat == w1a @ x_flat + x_last.
    sel = jnp.zeros((C, C * T), w1m.dtype).at[
        jnp.arange(C), jnp.arange(C) * T + (T - 1)].set(1.0)
    w1a = w1m[:C] + sel
    w1b = w1m[C:]
    b1a = b1[:C].reshape(C, 1)
    b1b = b1[C:].reshape(C, 1)
    gammaT = jnp.transpose(gamma)                # (C, n)
    betaT = jnp.transpose(beta)                  # (C, n)
    w2m = w2.reshape(C, C)
    b2m = b2.reshape(C, 1)
    w3m = w3.reshape(d_out, C)
    b3m = b3.reshape(d_out, 1)

    if use_bf16_inputs:
        # Optional HBM-bandwidth saver (kernel is bound on reading x); matmuls
        # still accumulate in f32 and LayerNorm / sigmoid stay in f32.
        x2 = x2.astype(jnp.bfloat16)
        w1a = w1a.astype(jnp.bfloat16)
        w1b = w1b.astype(jnp.bfloat16)

    itemsize = x2.dtype.itemsize
    TB = _choose_tb(B, C, T, n, itemsize, target_block_bytes)
    grid = (B // TB,)

    # Explicit VMEM budget: double-buffered x/out blocks, weights counted twice
    # (conservative), plus slack; clamped so it also fits v7x's 64 MiB VMEM.
    x2_block_bytes = TB * C * T * n * itemsize
    out_block_bytes = TB * d_out * n * 4
    w_bytes = sum(int(a.size) * a.dtype.itemsize
                  for a in (w1a, w1b, b1a, b1b, gammaT, betaT, w2m, b2m, w3m, b3m))
    vmem_limit = 2 * (x2_block_bytes + out_block_bytes) + 2 * w_bytes + (4 << 20)
    vmem_limit = int(min(max(vmem_limit, 8 << 20), 48 << 20))

    const = lambda b: (0, 0)
    out = pl.pallas_call(
        _output_kernel,
        out_shape=jax.ShapeDtypeStruct((B, d_out, n), jnp.float32),
        grid_spec=pltpu.PrefetchScalarGridSpec(
            num_scalar_prefetch=0,
            grid=grid,
            in_specs=[
                pl.BlockSpec((TB, C * T, n), lambda b: (b, 0, 0)),   # x2 (batch-tiled)
                pl.BlockSpec((C, C * T), const),                     # w1a (+ residual)
                pl.BlockSpec((C, C * T), const),                     # w1b
                pl.BlockSpec((C, 1), const),                         # b1a
                pl.BlockSpec((C, 1), const),                         # b1b
                pl.BlockSpec((C, n), const),                         # gamma^T
                pl.BlockSpec((C, n), const),                         # beta^T
                pl.BlockSpec((C, C), const),                         # w2
                pl.BlockSpec((C, 1), const),                         # b2
                pl.BlockSpec((d_out, C), const),                     # w3
                pl.BlockSpec((d_out, 1), const),                     # b3
            ],
            out_specs=pl.BlockSpec((TB, d_out, n), lambda b: (b, 0, 0)),
        ),
        compiler_params=pltpu.CompilerParams(
            dimension_semantics=("parallel",),     # megacore / 2-TC sharding on v7x
            vmem_limit_bytes=vmem_limit,
        ),
    )(x2, w1a, w1b, b1a, b1b, gammaT, betaT, w2m, b2m, w3m, b3m)

    # (B, d_out, n) -> (B, d_out, 1, n): pure reshape, no transpose, no padding.
    return out[:, :, None, :]


def output_reference(x, params):
    """Independent plain-JAX reference (conv written as einsum over (ci, t))."""
    B, C, T, n = x.shape
    w1 = params["w_tconv"][..., 0]            # (2C, C, T)
    y = jnp.einsum("bctn,oct->bon", x, w1, precision="highest") \
        + params["b_tconv"][None, :, None]                        # (B, 2C, n)
    x_input = x[:, :, T - 1, :]                                    # (B, C, n)
    glu = (y[:, :C] + x_input) * jax.nn.sigmoid(y[:, C:])          # (B, C, n)

    h = jnp.transpose(glu, (0, 2, 1))                              # (B, n, C)
    mu = jnp.mean(h, axis=(1, 2), keepdims=True)
    var = jnp.mean((h - mu) ** 2, axis=(1, 2), keepdims=True)
    h = (h - mu) / jnp.sqrt(var + EPS) * params["gamma"][None] + params["beta"][None]

    w2 = params["w_tcl2"][..., 0, 0]                               # (C, C)
    z = jax.nn.sigmoid(
        jnp.einsum("bnc,oc->bno", h, w2, precision="highest")
        + params["b_tcl2"][None, None, :])                         # (B, n, C)

    w3 = params["w_fcon"][..., 0, 0]                               # (d_out, C)
    o = jnp.einsum("bnc,oc->bno", z, w3, precision="highest") \
        + params["b_fcon"][None, None, :]                          # (B, n, d_out)
    return jnp.transpose(o, (0, 2, 1))[:, :, None, :]              # (B, d_out, 1, n)


def init_params(key, C, T, n, d_out):
    ks = jax.random.split(key, 8)
    s = 0.1
    return {
        "w_tconv": s * jax.random.normal(ks[0], (2 * C, C, T, 1), jnp.float32),
        "b_tconv": s * jax.random.normal(ks[1], (2 * C,), jnp.float32),
        "gamma": 1.0 + s * jax.random.normal(ks[2], (n, C), jnp.float32),
        "beta": s * jax.random.normal(ks[3], (n, C), jnp.float32),
        "w_tcl2": s * jax.random.normal(ks[4], (C, C, 1, 1), jnp.float32),
        "b_tcl2": s * jax.random.normal(ks[5], (C,), jnp.float32),
        "w_fcon": s * jax.random.normal(ks[6], (d_out, C, 1, 1), jnp.float32),
        "b_fcon": s * jax.random.normal(ks[7], (d_out,), jnp.float32),
    }


if __name__ == "__main__":
    B, C, T, n, d_out = 4, 4, 8, 16, 2
    key = jax.random.PRNGKey(0)
    kx, kp = jax.random.split(key)
    x = jax.random.normal(kx, (B, C, T, n), jnp.float32)
    params = init_params(kp, C, T, n, d_out)

    out = jax.block_until_ready(output_forward(x, params))
    ref = jax.block_until_ready(output_reference(x, params))

    assert out.shape == (B, d_out, 1, n), out.shape
    err = float(jnp.max(jnp.abs(out - ref)))
    assert jnp.allclose(out, ref, atol=1e-4, rtol=1e-4), err
    print("KERNEL_OK")
</pallas_src>

<mosaic_0001>
module attributes {stable_mosaic.version = 11 : i64} {
  func.func @_output_kernel(%arg0: i32, %arg1: memref<2x32x16xf32, #tpu.memory_space<vmem>>, %arg2: memref<4x32xf32, #tpu.memory_space<vmem>>, %arg3: memref<4x32xf32, #tpu.memory_space<vmem>>, %arg4: memref<4x1xf32, #tpu.memory_space<vmem>>, %arg5: memref<4x1xf32, #tpu.memory_space<vmem>>, %arg6: memref<4x16xf32, #tpu.memory_space<vmem>>, %arg7: memref<4x16xf32, #tpu.memory_space<vmem>>, %arg8: memref<4x4xf32, #tpu.memory_space<vmem>>, %arg9: memref<4x1xf32, #tpu.memory_space<vmem>>, %arg10: memref<2x4xf32, #tpu.memory_space<vmem>>, %arg11: memref<2x1xf32, #tpu.memory_space<vmem>>, %arg12: memref<2x2x16xf32, #tpu.memory_space<vmem>>) attributes {dimension_semantics = [#tpu.dimension_semantics<parallel>], iteration_bounds = array<i64: 2>, scalar_prefetch = 0 : i64, scratch_operands = 0 : i64, tpu.core_type = #tpu.core_type<tc>, window_params = [{transform_indices = @transform_0, window_bounds = array<i64: 2, 32, 16>}, {pipeline_mode = #tpu.pipeline_mode<synchronous>, transform_indices = @transform_1, window_bounds = array<i64: 4, 32>}, {pipeline_mode = #tpu.pipeline_mode<synchronous>, transform_indices = @transform_2, window_bounds = array<i64: 4, 32>}, {pipeline_mode = #tpu.pipeline_mode<synchronous>, transform_indices = @transform_3, window_bounds = array<i64: 4, 1>}, {pipeline_mode = #tpu.pipeline_mode<synchronous>, transform_indices = @transform_4, window_bounds = array<i64: 4, 1>}, {pipeline_mode = #tpu.pipeline_mode<synchronous>, transform_indices = @transform_5, window_bounds = array<i64: 4, 16>}, {pipeline_mode = #tpu.pipeline_mode<synchronous>, transform_indices = @transform_6, window_bounds = array<i64: 4, 16>}, {pipeline_mode = #tpu.pipeline_mode<synchronous>, transform_indices = @transform_7, window_bounds = array<i64: 4, 4>}, {pipeline_mode = #tpu.pipeline_mode<synchronous>, transform_indices = @transform_8, window_bounds = array<i64: 4, 1>}, {pipeline_mode = #tpu.pipeline_mode<synchronous>, transform_indices = @transform_9, window_bounds = array<i64: 2, 4>}, {pipeline_mode = #tpu.pipeline_mode<synchronous>, transform_indices = @transform_10, window_bounds = array<i64: 2, 1>}, {transform_indices = @transform_11, window_bounds = array<i64: 2, 2, 16>}]} {
    %c0 = arith.constant 0 : index
    %c0_0 = arith.constant 0 : index
    %0 = vector.load %arg2[%c0, %c0_0] : memref<4x32xf32, #tpu.memory_space<vmem>>, vector<4x32xf32>
    %c0_1 = arith.constant 0 : index
    %c0_2 = arith.constant 0 : index
    %1 = vector.load %arg3[%c0_1, %c0_2] : memref<4x32xf32, #tpu.memory_space<vmem>>, vector<4x32xf32>
    %c0_3 = arith.constant 0 : index
    %c0_4 = arith.constant 0 : index
    %2 = vector.load %arg4[%c0_3, %c0_4] : memref<4x1xf32, #tpu.memory_space<vmem>>, vector<4x1xf32>
    %c0_5 = arith.constant 0 : index
    %c0_6 = arith.constant 0 : index
    %3 = vector.load %arg5[%c0_5, %c0_6] : memref<4x1xf32, #tpu.memory_space<vmem>>, vector<4x1xf32>
    %c0_7 = arith.constant 0 : index
    %c0_8 = arith.constant 0 : index
    %4 = vector.load %arg6[%c0_7, %c0_8] : memref<4x16xf32, #tpu.memory_space<vmem>>, vector<4x16xf32>
    %c0_9 = arith.constant 0 : index
    %c0_10 = arith.constant 0 : index
    %5 = vector.load %arg7[%c0_9, %c0_10] : memref<4x16xf32, #tpu.memory_space<vmem>>, vector<4x16xf32>
    %c0_11 = arith.constant 0 : index
    %c0_12 = arith.constant 0 : index
    %6 = vector.load %arg8[%c0_11, %c0_12] : memref<4x4xf32, #tpu.memory_space<vmem>>, vector<4x4xf32>
    %c0_13 = arith.constant 0 : index
    %c0_14 = arith.constant 0 : index
    %7 = vector.load %arg9[%c0_13, %c0_14] : memref<4x1xf32, #tpu.memory_space<vmem>>, vector<4x1xf32>
    %c0_15 = arith.constant 0 : index
    %c0_16 = arith.constant 0 : index
    %8 = vector.load %arg10[%c0_15, %c0_16] : memref<2x4xf32, #tpu.memory_space<vmem>>, vector<2x4xf32>
    %c0_17 = arith.constant 0 : index
    %c0_18 = arith.constant 0 : index
    %9 = vector.load %arg11[%c0_17, %c0_18] : memref<2x1xf32, #tpu.memory_space<vmem>>, vector<2x1xf32>
    %c0_i32 = arith.constant 0 : i32
    %10 = arith.index_cast %c0_i32 : i32 to index
    %c0_19 = arith.constant 0 : index
    %c0_20 = arith.constant 0 : index
    %11 = vector.load %arg1[%10, %c0_19, %c0_20] : memref<2x32x16xf32, #tpu.memory_space<vmem>>, vector<1x32x16xf32>
    %12 = vector.shape_cast %11 : vector<1x32x16xf32> to vector<32x16xf32>
    %cst = arith.constant dense<0.000000e+00> : vector<4x16xf32>
    %13 = tpu.matmul %0, %12, %cst {dimension_numbers = #tpu.dot_dimension_numbers<[1], [0], [0], [1], [0, 0, 1, 1], [], []>} : vector<4x32xf32>, vector<32x16xf32>, vector<4x16xf32> -> vector<4x16xf32>
    %14 = vector.broadcast %2 : vector<4x1xf32> to vector<4x16xf32>
    %15 = arith.addf %13, %14 : vector<4x16xf32>
    %cst_21 = arith.constant dense<0.000000e+00> : vector<4x16xf32>
    %16 = tpu.matmul %1, %12, %cst_21 {dimension_numbers = #tpu.dot_dimension_numbers<[1], [0], [0], [1], [0, 0, 1, 1], [], []>} : vector<4x32xf32>, vector<32x16xf32>, vector<4x16xf32> -> vector<4x16xf32>
    %17 = vector.broadcast %3 : vector<4x1xf32> to vector<4x16xf32>
    %18 = arith.addf %16, %17 : vector<4x16xf32>
    %19 = arith.negf %18 : vector<4x16xf32>
    %20 = math.exp %19 : vector<4x16xf32>
    %cst_22 = arith.constant 1.000000e+00 : f32
    %21 = vector.broadcast %cst_22 : f32 to vector<4x16xf32>
    %22 = arith.addf %21, %20 : vector<4x16xf32>
    %23 = arith.divf %21, %22 : vector<4x16xf32>
    %24 = arith.mulf %15, %23 : vector<4x16xf32>
    %25 = vector.shape_cast %24 : vector<4x16xf32> to vector<1x4x16xf32>
    %cst_23 = arith.constant dense<0.000000e+00> : vector<1xf32>
    %26 = vector.multi_reduction <add>, %25, %cst_23 [1, 2] : vector<1x4x16xf32> to vector<1xf32>
    %27 = vector.shape_cast %26 : vector<1xf32> to vector<1x1x1xf32>
    %28 = vector.extract %27[0, 0, 0] : f32 from vector<1x1x1xf32>
    %29 = arith.mulf %24, %24 : vector<4x16xf32>
    %30 = vector.shape_cast %29 : vector<4x16xf32> to vector<1x4x16xf32>
    %cst_24 = arith.constant dense<0.000000e+00> : vector<1xf32>
    %31 = vector.multi_reduction <add>, %30, %cst_24 [1, 2] : vector<1x4x16xf32> to vector<1xf32>
    %32 = vector.shape_cast %31 : vector<1xf32> to vector<1x1x1xf32>
    %33 = vector.extract %32[0, 0, 0] : f32 from vector<1x1x1xf32>
    %cst_25 = arith.constant 1.562500e-02 : f32
    %34 = arith.mulf %28, %cst_25 : f32
    %cst_26 = arith.constant 1.562500e-02 : f32
    %35 = arith.mulf %33, %cst_26 : f32
    %36 = arith.mulf %34, %34 : f32
    %37 = arith.subf %35, %36 : f32
    %38 = vector.broadcast %34 : f32 to vector<4x16xf32>
    %39 = arith.subf %24, %38 : vector<4x16xf32>
    %cst_27 = arith.constant 9.99999974E-6 : f32
    %40 = arith.addf %37, %cst_27 : f32
    %41 = math.rsqrt %40 : f32
    %42 = vector.broadcast %41 : f32 to vector<4x16xf32>
    %43 = arith.mulf %39, %42 : vector<4x16xf32>
    %44 = arith.mulf %43, %4 : vector<4x16xf32>
    %45 = arith.addf %44, %5 : vector<4x16xf32>
    %cst_28 = arith.constant dense<0.000000e+00> : vector<4x16xf32>
    %46 = tpu.matmul %6, %45, %cst_28 {dimension_numbers = #tpu.dot_dimension_numbers<[1], [0], [0], [1], [0, 0, 1, 1], [], []>} : vector<4x4xf32>, vector<4x16xf32>, vector<4x16xf32> -> vector<4x16xf32>
    %47 = vector.broadcast %7 : vector<4x1xf32> to vector<4x16xf32>
    %48 = arith.addf %46, %47 : vector<4x16xf32>
    %49 = arith.negf %48 : vector<4x16xf32>
    %50 = math.exp %49 : vector<4x16xf32>
    %cst_29 = arith.constant 1.000000e+00 : f32
    %51 = vector.broadcast %cst_29 : f32 to vector<4x16xf32>
    %52 = arith.addf %51, %50 : vector<4x16xf32>
    %53 = arith.divf %51, %52 : vector<4x16xf32>
    %cst_30 = arith.constant dense<0.000000e+00> : vector<2x16xf32>
    %54 = tpu.matmul %8, %53, %cst_30 {dimension_numbers = #tpu.dot_dimension_numbers<[1], [0], [0], [1], [0, 0, 1, 1], [], []>} : vector<2x4xf32>, vector<4x16xf32>, vector<2x16xf32> -> vector<2x16xf32>
    %55 = vector.broadcast %9 : vector<2x1xf32> to vector<2x16xf32>
    %56 = arith.addf %54, %55 : vector<2x16xf32>
    %57 = arith.index_cast %c0_i32 : i32 to index
    %c0_31 = arith.constant 0 : index
    %c0_32 = arith.constant 0 : index
    %58 = vector.load %arg12[%57, %c0_31, %c0_32] : memref<2x2x16xf32, #tpu.memory_space<vmem>>, vector<1x2x16xf32>
    %59 = vector.shape_cast %58 : vector<1x2x16xf32> to vector<2x16xf32>
    %60 = vector.shape_cast %56 : vector<2x16xf32> to vector<1x2x16xf32>
    tpu.vector_store %arg12[%57, %c0_31, %c0_32], %60 {strides = array<i32>} : memref<2x2x16xf32, #tpu.memory_space<vmem>>, vector<1x2x16xf32>,
    %c1_i32 = arith.constant 1 : i32
    %61 = arith.index_cast %c1_i32 : i32 to index
    %c0_33 = arith.constant 0 : index
    %c0_34 = arith.constant 0 : index
    %62 = vector.load %arg1[%61, %c0_33, %c0_34] : memref<2x32x16xf32, #tpu.memory_space<vmem>>, vector<1x32x16xf32>
    %63 = vector.shape_cast %62 : vector<1x32x16xf32> to vector<32x16xf32>
    %cst_35 = arith.constant dense<0.000000e+00> : vector<4x16xf32>
    %64 = tpu.matmul %0, %63, %cst_35 {dimension_numbers = #tpu.dot_dimension_numbers<[1], [0], [0], [1], [0, 0, 1, 1], [], []>} : vector<4x32xf32>, vector<32x16xf32>, vector<4x16xf32> -> vector<4x16xf32>
    %65 = vector.broadcast %2 : vector<4x1xf32> to vector<4x16xf32>
    %66 = arith.addf %64, %65 : vector<4x16xf32>
    %cst_36 = arith.constant dense<0.000000e+00> : vector<4x16xf32>
    %67 = tpu.matmul %1, %63, %cst_36 {dimension_numbers = #tpu.dot_dimension_numbers<[1], [0], [0], [1], [0, 0, 1, 1], [], []>} : vector<4x32xf32>, vector<32x16xf32>, vector<4x16xf32> -> vector<4x16xf32>
    %68 = vector.broadcast %3 : vector<4x1xf32> to vector<4x16xf32>
    %69 = arith.addf %67, %68 : vector<4x16xf32>
    %70 = arith.negf %69 : vector<4x16xf32>
    %71 = math.exp %70 : vector<4x16xf32>
    %cst_37 = arith.constant 1.000000e+00 : f32
    %72 = vector.broadcast %cst_37 : f32 to vector<4x16xf32>
    %73 = arith.addf %72, %71 : vector<4x16xf32>
    %74 = arith.divf %72, %73 : vector<4x16xf32>
    %75 = arith.mulf %66, %74 : vector<4x16xf32>
    %76 = vector.shape_cast %75 : vector<4x16xf32> to vector<1x4x16xf32>
    %cst_38 = arith.constant dense<0.000000e+00> : vector<1xf32>
    %77 = vector.multi_reduction <add>, %76, %cst_38 [1, 2] : vector<1x4x16xf32> to vector<1xf32>
    %78 = vector.shape_cast %77 : vector<1xf32> to vector<1x1x1xf32>
    %79 = vector.extract %78[0, 0, 0] : f32 from vector<1x1x1xf32>
    %80 = arith.mulf %75, %75 : vector<4x16xf32>
    %81 = vector.shape_cast %80 : vector<4x16xf32> to vector<1x4x16xf32>
    %cst_39 = arith.constant dense<0.000000e+00> : vector<1xf32>
    %82 = vector.multi_reduction <add>, %81, %cst_39 [1, 2] : vector<1x4x16xf32> to vector<1xf32>
    %83 = vector.shape_cast %82 : vector<1xf32> to vector<1x1x1xf32>
    %84 = vector.extract %83[0, 0, 0] : f32 from vector<1x1x1xf32>
    %cst_40 = arith.constant 1.562500e-02 : f32
    %85 = arith.mulf %79, %cst_40 : f32
    %cst_41 = arith.constant 1.562500e-02 : f32
    %86 = arith.mulf %84, %cst_41 : f32
    %87 = arith.mulf %85, %85 : f32
    %88 = arith.subf %86, %87 : f32
    %89 = vector.broadcast %85 : f32 to vector<4x16xf32>
    %90 = arith.subf %75, %89 : vector<4x16xf32>
    %cst_42 = arith.constant 9.99999974E-6 : f32
    %91 = arith.addf %88, %cst_42 : f32
    %92 = math.rsqrt %91 : f32
    %93 = vector.broadcast %92 : f32 to vector<4x16xf32>
    %94 = arith.mulf %90, %93 : vector<4x16xf32>
    %95 = arith.mulf %94, %4 : vector<4x16xf32>
    %96 = arith.addf %95, %5 : vector<4x16xf32>
    %cst_43 = arith.constant dense<0.000000e+00> : vector<4x16xf32>
    %97 = tpu.matmul %6, %96, %cst_43 {dimension_numbers = #tpu.dot_dimension_numbers<[1], [0], [0], [1], [0, 0, 1, 1], [], []>} : vector<4x4xf32>, vector<4x16xf32>, vector<4x16xf32> -> vector<4x16xf32>
    %98 = vector.broadcast %7 : vector<4x1xf32> to vector<4x16xf32>
    %99 = arith.addf %97, %98 : vector<4x16xf32>
    %100 = arith.negf %99 : vector<4x16xf32>
    %101 = math.exp %100 : vector<4x16xf32>
    %cst_44 = arith.constant 1.000000e+00 : f32
    %102 = vector.broadcast %cst_44 : f32 to vector<4x16xf32>
    %103 = arith.addf %102, %101 : vector<4x16xf32>
    %104 = arith.divf %102, %103 : vector<4x16xf32>
    %cst_45 = arith.constant dense<0.000000e+00> : vector<2x16xf32>
    %105 = tpu.matmul %8, %104, %cst_45 {dimension_numbers = #tpu.dot_dimension_numbers<[1], [0], [0], [1], [0, 0, 1, 1], [], []>} : vector<2x4xf32>, vector<4x16xf32>, vector<2x16xf32> -> vector<2x16xf32>
    %106 = vector.broadcast %9 : vector<2x1xf32> to vector<2x16xf32>
    %107 = arith.addf %105, %106 : vector<2x16xf32>
    %108 = arith.index_cast %c1_i32 : i32 to index
    %c0_46 = arith.constant 0 : index
    %c0_47 = arith.constant 0 : index
    %109 = vector.load %arg12[%108, %c0_46, %c0_47] : memref<2x2x16xf32, #tpu.memory_space<vmem>>, vector<1x2x16xf32>
    %110 = vector.shape_cast %109 : vector<1x2x16xf32> to vector<2x16xf32>
    %111 = vector.shape_cast %107 : vector<2x16xf32> to vector<1x2x16xf32>
    tpu.vector_store %arg12[%108, %c0_46, %c0_47], %111 {strides = array<i32>} : memref<2x2x16xf32, #tpu.memory_space<vmem>>, vector<1x2x16xf32>,
    %c2_i32 = arith.constant 2 : i32
    return
  }
  func.func @transform_0(%arg0: i32) -> (i32, i32, i32) {
    %c0_i32 = arith.constant 0 : i32
    %c0_i32_0 = arith.constant 0 : i32
    %c0_i32_1 = arith.constant 0 : i32
    return %arg0, %c0_i32, %c0_i32_0 : i32, i32, i32
  }
  func.func @transform_1(%arg0: i32) -> (i32, i32) {
    %c0_i32 = arith.constant 0 : i32
    %c0_i32_0 = arith.constant 0 : i32
    %c0_i32_1 = arith.constant 0 : i32
    return %c0_i32, %c0_i32_0 : i32, i32
  }
  func.func @transform_2(%arg0: i32) -> (i32, i32) {
    %c0_i32 = arith.constant 0 : i32
    %c0_i32_0 = arith.constant 0 : i32
    %c0_i32_1 = arith.constant 0 : i32
    return %c0_i32, %c0_i32_0 : i32, i32
  }
  func.func @transform_3(%arg0: i32) -> (i32, i32) {
    %c0_i32 = arith.constant 0 : i32
    %c0_i32_0 = arith.constant 0 : i32
    %c0_i32_1 = arith.constant 0 : i32
    return %c0_i32, %c0_i32_0 : i32, i32
  }
  func.func @transform_4(%arg0: i32) -> (i32, i32) {
    %c0_i32 = arith.constant 0 : i32
    %c0_i32_0 = arith.constant 0 : i32
    %c0_i32_1 = arith.constant 0 : i32
    return %c0_i32, %c0_i32_0 : i32, i32
  }
  func.func @transform_5(%arg0: i32) -> (i32, i32) {
    %c0_i32 = arith.constant 0 : i32
    %c0_i32_0 = arith.constant 0 : i32
    %c0_i32_1 = arith.constant 0 : i32
    return %c0_i32, %c0_i32_0 : i32, i32
  }
  func.func @transform_6(%arg0: i32) -> (i32, i32) {
    %c0_i32 = arith.constant 0 : i32
    %c0_i32_0 = arith.constant 0 : i32
    %c0_i32_1 = arith.constant 0 : i32
    return %c0_i32, %c0_i32_0 : i32, i32
  }
  func.func @transform_7(%arg0: i32) -> (i32, i32) {
    %c0_i32 = arith.constant 0 : i32
    %c0_i32_0 = arith.constant 0 : i32
    %c0_i32_1 = arith.constant 0 : i32
    return %c0_i32, %c0_i32_0 : i32, i32
  }
  func.func @transform_8(%arg0: i32) -> (i32, i32) {
    %c0_i32 = arith.constant 0 : i32
    %c0_i32_0 = arith.constant 0 : i32
    %c0_i32_1 = arith.constant 0 : i32
    return %c0_i32, %c0_i32_0 : i32, i32
  }
  func.func @transform_9(%arg0: i32) -> (i32, i32) {
    %c0_i32 = arith.constant 0 : i32
    %c0_i32_0 = arith.constant 0 : i32
    %c0_i32_1 = arith.constant 0 : i32
    return %c0_i32, %c0_i32_0 : i32, i32
  }
  func.func @transform_10(%arg0: i32) -> (i32, i32) {
    %c0_i32 = arith.constant 0 : i32
    %c0_i32_0 = arith.constant 0 : i32
    %c0_i32_1 = arith.constant 0 : i32
    return %c0_i32, %c0_i32_0 : i32, i32
  }
  func.func @transform_11(%arg0: i32) -> (i32, i32, i32) {
    %c0_i32 = arith.constant 0 : i32
    %c0_i32_0 = arith.constant 0 : i32
    %c0_i32_1 = arith.constant 0 : i32
    return %arg0, %c0_i32, %c0_i32_0 : i32, i32, i32
  }
}

</mosaic_0001>

<llo_original>
// kernel: tpu_custom_call.1
$region0: #{tpu_custom_call.1}
  #allocation0 [shape = 'u32[]', space=smem, size = 0x4, offset = 0x4, fixed_abs, tag = 'smem constant byte address 0x4 - core index']
  #allocation1 [shape = 'u32[72,128]{1,0:T(1,128)}', space=vmem, size = 0x9000, scoped, tag = 'internal scratch']
  %s0 = inlined_call_operand.vmem [shape: f32[4,32,16], index: 0, kind: input, shape index: {}]
  %s1 = inlined_call_operand.vmem [shape: f32[4,32], index: 1, kind: input, shape index: {}]
  %s2 = inlined_call_operand.vmem [shape: f32[4,32], index: 2, kind: input, shape index: {}]
  %s3 = inlined_call_operand.vmem [shape: f32[4,1], index: 3, kind: input, shape index: {}]
  %s4 = inlined_call_operand.vmem [shape: f32[4,1], index: 4, kind: input, shape index: {}]
  %s5 = inlined_call_operand.vmem [shape: f32[4,16], index: 5, kind: input, shape index: {}]
  %s6 = inlined_call_operand.vmem [shape: f32[4,16], index: 6, kind: input, shape index: {}]
  %s7 = inlined_call_operand.vmem [shape: f32[4,4], index: 7, kind: input, shape index: {}]
  %s8 = inlined_call_operand.vmem [shape: f32[4,1], index: 8, kind: input, shape index: {}]
  %s9 = inlined_call_operand.vmem [shape: f32[2,4], index: 9, kind: input, shape index: {}]
  %s10 = inlined_call_operand.vmem [shape: f32[2,1], index: 10, kind: input, shape index: {}]
  %s11 = inlined_call_operand.hbm [shape: f32[4,2,16], index: 11, kind: output, shape index: {}]
  %s12 = sld [smem:[#allocation0]]
  $region77: #{tpu_custom_call.1} parent=0
    _
  %s14 = ssub.s32 1, %s12
  %s15 = scalar_select 0, %s14, %s12
  $region1: #{tpu_custom_call.1} parent=0
    #allocation2 [shape = 'u8[4096]{0}', space=vmem, size = 0x1000, scoped, tag = 'output window, operand 0']
    #allocation3 [shape = 's32[2]{0}', space=sflag, size = 0x8, scoped, tag = 'scoped memory for tpu_custom_call.1']
    %16 = vsyncpa [#allocation3], 0
    %s17 = scalar_lea.sflag [#allocation3], 1
    %18 = vsyncpa %s17, 0
    loop: start=0, step=1, limit=4
    $region2: #{tpu_custom_call.1} parent=1 // loop_pre_header
      _
    $region3: #{tpu_custom_call.1} parent=1 // loop_header
      %s20 = sphi 0, %s24
      %p21 = scmp.ge.s32.totalorder %s20, 4
      %s30 = sphi 0, %s32
      %s33 = sphi 0, %s30
      %s34 = sphi 0, %s33
      %s50 = sphi 0, %s34
      %s54 = sphi 0, %s54
      %s56 = sphi 0, %s54
      %s57 = sphi 0, %s56
      %s71 = sphi 0, %s57
      %s75 = sphi 0, %s75
      %s77 = sphi 0, %s75
      %s78 = sphi 0, %s77
      %s92 = sphi 0, %s78
      %s96 = sphi 0, %s96
      %s98 = sphi 0, %s96
      %s99 = sphi 0, %s98
      %s113 = sphi 0, %s99
      %s117 = sphi 0, %s117
      %s119 = sphi 0, %s117
      %s120 = sphi 0, %s119
      %s134 = sphi 0, %s120
      %s138 = sphi 0, %s138
      %s140 = sphi 0, %s138
      %s141 = sphi 0, %s140
      %s155 = sphi 0, %s141
      %s159 = sphi 0, %s159
      %s161 = sphi 0, %s159
      %s162 = sphi 0, %s161
      %s176 = sphi 0, %s162
      %s180 = sphi 0, %s180
      %s182 = sphi 0, %s180
      %s183 = sphi 0, %s182
      %s197 = sphi 0, %s183
      %s201 = sphi 0, %s201
      %s203 = sphi 0, %s201
      %s204 = sphi 0, %s203
      %s218 = sphi 0, %s204
      %s222 = sphi 0, %s222
      %s224 = sphi 0, %s222
      %s225 = sphi 0, %s224
      %s239 = sphi 0, %s225
      %s243 = sphi 0, %s243
      %s245 = sphi 0, %s243
      %s246 = sphi 0, %s245
      %s260 = sphi 0, %s246
      %s266 = sphi 0, %s268
      %s269 = sphi 0, %s266
      %s270 = sphi 0, %s269
      %s286 = sphi 0, %s270
    $region4: #{tpu_custom_call.1} parent=1 // loop_header_branch
      %23 = sbr.rel (%p21) target = $region8
    $region5: #{tpu_custom_call.1} parent=1 // loop_body
      %s25 = ssub.s32 %s20, 1
      %s26 = ssub.s32 %s20, 2
      %s27 = sadd.s32 %s20, 1
      %s28 = ssub.s32 %s20, %s27
      %p29 = scmp.eq.s32.totalorder %s28, 0
      %s31 = sadd.s32 %s30, 1
      %s32 = scalar_select %p29, %s30, %s31
      %p35 = pneg %p29
      %p36 = scmp.eq.s32.totalorder %s20, 1
      %p37 = por %p35, %p36
      %p38 = scmp.ne.s32.totalorder %s30, %s33
      %p39 = scmp.eq.s32.totalorder %s20, 0
      %p40 = por %p38, %p39
      %p41 = scmp.ne.s32.totalorder %s30, %s33
      %p42 = scmp.eq.s32.totalorder %s25, 1
      %p43 = por %p41, %p42
      %p44 = scmp.ne.s32.totalorder %s33, %s34
      %p45 = scmp.eq.s32.totalorder %s25, 0
      %p46 = por %p44, %p45
      %p47 = scmp.ne.s32.totalorder %s33, %s34
      %p48 = scmp.eq.s32.totalorder %s26, 1
      %p49 = por %p47, %p48
      %p51 = scmp.ne.s32.totalorder %s34, %s50
      %p52 = scmp.eq.s32.totalorder %s26, 0
      %p53 = por %p51, %p52
      %s55 = sadd.s32 %s54, 1
      %p58 = scmp.eq.s32.totalorder %s20, 1
      %p59 = scmp.ne.s32.totalorder %s54, %s56
      %p60 = scmp.eq.s32.totalorder %s20, 0
      %p61 = por %p59, %p60
      %p62 = scmp.ne.s32.totalorder %s54, %s56
      %p63 = scmp.eq.s32.totalorder %s25, 1
      %p64 = por %p62, %p63
      %p65 = scmp.ne.s32.totalorder %s56, %s57
      %p66 = scmp.eq.s32.totalorder %s25, 0
      %p67 = por %p65, %p66
      %p68 = scmp.ne.s32.totalorder %s56, %s57
      %p69 = scmp.eq.s32.totalorder %s26, 1
      %p70 = por %p68, %p69
      %p72 = scmp.ne.s32.totalorder %s57, %s71
      %p73 = scmp.eq.s32.totalorder %s26, 0
      %p74 = por %p72, %p73
      %s76 = sadd.s32 %s75, 1
      %p79 = scmp.eq.s32.totalorder %s20, 1
      %p80 = scmp.ne.s32.totalorder %s75, %s77
      %p81 = scmp.eq.s32.totalorder %s20, 0
      %p82 = por %p80, %p81
      %p83 = scmp.ne.s32.totalorder %s75, %s77
      %p84 = scmp.eq.s32.totalorder %s25, 1
      %p85 = por %p83, %p84
      %p86 = scmp.ne.s32.totalorder %s77, %s78
      %p87 = scmp.eq.s32.totalorder %s25, 0
      %p88 = por %p86, %p87
      %p89 = scmp.ne.s32.totalorder %s77, %s78
      %p90 = scmp.eq.s32.totalorder %s26, 1
      %p91 = por %p89, %p90
      %p93 = scmp.ne.s32.totalorder %s78, %s92
      %p94 = scmp.eq.s32.totalorder %s26, 0
      %p95 = por %p93, %p94
      %s97 = sadd.s32 %s96, 1
      %p100 = scmp.eq.s32.totalorder %s20, 1
      %p101 = scmp.ne.s32.totalorder %s96, %s98
      %p102 = scmp.eq.s32.totalorder %s20, 0
      %p103 = por %p101, %p102
      %p104 = scmp.ne.s32.totalorder %s96, %s98
      %p105 = scmp.eq.s32.totalorder %s25, 1
      %p106 = por %p104, %p105
      %p107 = scmp.ne.s32.totalorder %s98, %s99
      %p108 = scmp.eq.s32.totalorder %s25, 0
      %p109 = por %p107, %p108
      %p110 = scmp.ne.s32.totalorder %s98, %s99
      %p111 = scmp.eq.s32.totalorder %s26, 1
      %p112 = por %p110, %p111
      %p114 = scmp.ne.s32.totalorder %s99, %s113
      %p115 = scmp.eq.s32.totalorder %s26, 0
      %p116 = por %p114, %p115
      %s118 = sadd.s32 %s117, 1
      %p121 = scmp.eq.s32.totalorder %s20, 1
      %p122 = scmp.ne.s32.totalorder %s117, %s119
      %p123 = scmp.eq.s32.totalorder %s20, 0
      %p124 = por %p122, %p123
      %p125 = scmp.ne.s32.totalorder %s117, %s119
      %p126 = scmp.eq.s32.totalorder %s25, 1
      %p127 = por %p125, %p126
      %p128 = scmp.ne.s32.totalorder %s119, %s120
      %p129 = scmp.eq.s32.totalorder %s25, 0
      %p130 = por %p128, %p129
      %p131 = scmp.ne.s32.totalorder %s119, %s120
      %p132 = scmp.eq.s32.totalorder %s26, 1
      %p133 = por %p131, %p132
      %p135 = scmp.ne.s32.totalorder %s120, %s134
      %p136 = scmp.eq.s32.totalorder %s26, 0
      %p137 = por %p135, %p136
      %s139 = sadd.s32 %s138, 1
      %p142 = scmp.eq.s32.totalorder %s20, 1
      %p143 = scmp.ne.s32.totalorder %s138, %s140
      %p144 = scmp.eq.s32.totalorder %s20, 0
      %p145 = por %p143, %p144
      %p146 = scmp.ne.s32.totalorder %s138, %s140
      %p147 = scmp.eq.s32.totalorder %s25, 1
      %p148 = por %p146, %p147
      %p149 = scmp.ne.s32.totalorder %s140, %s141
      %p150 = scmp.eq.s32.totalorder %s25, 0
      %p151 = por %p149, %p150
      %p152 = scmp.ne.s32.totalorder %s140, %s141
      %p153 = scmp.eq.s32.totalorder %s26, 1
      %p154 = por %p152, %p153
      %p156 = scmp.ne.s32.totalorder %s141, %s155
      %p157 = scmp.eq.s32.totalorder %s26, 0
      %p158 = por %p156, %p157
      %s160 = sadd.s32 %s159, 1
      %p163 = scmp.eq.s32.totalorder %s20, 1
      %p164 = scmp.ne.s32.totalorder %s159, %s161
      %p165 = scmp.eq.s32.totalorder %s20, 0
      %p166 = por %p164, %p165
      %p167 = scmp.ne.s32.totalorder %s159, %s161
      %p168 = scmp.eq.s32.totalorder %s25, 1
      %p169 = por %p167, %p168
      %p170 = scmp.ne.s32.totalorder %s161, %s162
      %p171 = scmp.eq.s32.totalorder %s25, 0
      %p172 = por %p170, %p171
      %p173 = scmp.ne.s32.totalorder %s161, %s162
      %p174 = scmp.eq.s32.totalorder %s26, 1
      %p175 = por %p173, %p174
      %p177 = scmp.ne.s32.totalorder %s162, %s176
      %p178 = scmp.eq.s32.totalorder %s26, 0
      %p179 = por %p177, %p178
      %s181 = sadd.s32 %s180, 1
      %p184 = scmp.eq.s32.totalorder %s20, 1
      %p185 = scmp.ne.s32.totalorder %s180, %s182
      %p186 = scmp.eq.s32.totalorder %s20, 0
      %p187 = por %p185, %p186
      %p188 = scmp.ne.s32.totalorder %s180, %s182
      %p189 = scmp.eq.s32.totalorder %s25, 1
      %p190 = por %p188, %p189
      %p191 = scmp.ne.s32.totalorder %s182, %s183
      %p192 = scmp.eq.s32.totalorder %s25, 0
      %p193 = por %p191, %p192
      %p194 = scmp.ne.s32.totalorder %s182, %s183
      %p195 = scmp.eq.s32.totalorder %s26, 1
      %p196 = por %p194, %p195
      %p198 = scmp.ne.s32.totalorder %s183, %s197
      %p199 = scmp.eq.s32.totalorder %s26, 0
      %p200 = por %p198, %p199
      %s202 = sadd.s32 %s201, 1
      %p205 = scmp.eq.s32.totalorder %s20, 1
      %p206 = scmp.ne.s32.totalorder %s201, %s203
      %p207 = scmp.eq.s32.totalorder %s20, 0
      %p208 = por %p206, %p207
      %p209 = scmp.ne.s32.totalorder %s201, %s203
      %p210 = scmp.eq.s32.totalorder %s25, 1
      %p211 = por %p209, %p210
      %p212 = scmp.ne.s32.totalorder %s203, %s204
      %p213 = scmp.eq.s32.totalorder %s25, 0
      %p214 = por %p212, %p213
      %p215 = scmp.ne.s32.totalorder %s203, %s204
      %p216 = scmp.eq.s32.totalorder %s26, 1
      %p217 = por %p215, %p216
      %p219 = scmp.ne.s32.totalorder %s204, %s218
      %p220 = scmp.eq.s32.totalorder %s26, 0
      %p221 = por %p219, %p220
      %s223 = sadd.s32 %s222, 1
      %p226 = scmp.eq.s32.totalorder %s20, 1
      %p227 = scmp.ne.s32.totalorder %s222, %s224
      %p228 = scmp.eq.s32.totalorder %s20, 0
      %p229 = por %p227, %p228
      %p230 = scmp.ne.s32.totalorder %s222, %s224
      %p231 = scmp.eq.s32.totalorder %s25, 1
      %p232 = por %p230, %p231
      %p233 = scmp.ne.s32.totalorder %s224, %s225
      %p234 = scmp.eq.s32.totalorder %s25, 0
      %p235 = por %p233, %p234
      %p236 = scmp.ne.s32.totalorder %s224, %s225
      %p237 = scmp.eq.s32.totalorder %s26, 1
      %p238 = por %p236, %p237
      %p240 = scmp.ne.s32.totalorder %s225, %s239
      %p241 = scmp.eq.s32.totalorder %s26, 0
      %p242 = por %p240, %p241
      %s244 = sadd.s32 %s243, 1
      %p247 = scmp.eq.s32.totalorder %s20, 1
      %p248 = scmp.ne.s32.totalorder %s243, %s245
      %p249 = scmp.eq.s32.totalorder %s20, 0
      %p250 = por %p248, %p249
      %p251 = scmp.ne.s32.totalorder %s243, %s245
      %p252 = scmp.eq.s32.totalorder %s25, 1
      %p253 = por %p251, %p252
      %p254 = scmp.ne.s32.totalorder %s245, %s246
      %p255 = scmp.eq.s32.totalorder %s25, 0
      %p256 = por %p254, %p255
      %p257 = scmp.ne.s32.totalorder %s245, %s246
      %p258 = scmp.eq.s32.totalorder %s26, 1
      %p259 = por %p257, %p258
      %p261 = scmp.ne.s32.totalorder %s246, %s260
      %p262 = scmp.eq.s32.totalorder %s26, 0
      %p263 = por %p261, %p262
      %s264 = ssub.s32 %s20, %s27
      %p265 = scmp.eq.s32.totalorder %s264, 0
      %s267 = sadd.s32 %s266, 1
      %s268 = scalar_select %p265, %s266, %s267
      %p271 = pneg %p265
      %p272 = scmp.eq.s32.totalorder %s20, 1
      %p273 = por %p271, %p272
      %p274 = scmp.ne.s32.totalorder %s266, %s269
      %p275 = scmp.eq.s32.totalorder %s20, 0
      %p276 = por %p274, %p275
      %p277 = scmp.ne.s32.totalorder %s266, %s269
      %p278 = scmp.eq.s32.totalorder %s25, 1
      %p279 = por %p277, %p278
      %p280 = scmp.ne.s32.totalorder %s269, %s270
      %p281 = scmp.eq.s32.totalorder %s25, 0
      %p282 = por %p280, %p281
      %p283 = scmp.ne.s32.totalorder %s269, %s270
      %p284 = scmp.eq.s32.totalorder %s26, 1
      %p285 = por %p283, %p284
      %p287 = scmp.ne.s32.totalorder %s270, %s286
      %p288 = scmp.eq.s32.totalorder %s26, 0
      %p289 = por %p287, %p288
      %p290 = scmp.le.s32.totalorder 1, %s20
      %p291 = scmp.lt.s32.totalorder %s20, 3
      %p292 = pnand %p290, %p291
      %p293 = pneg %p292
      // Predicated region
      $region9: #{tpu_custom_call.1} parent=5 // pred_check
        _
      $region10: #{tpu_custom_call.1} parent=5 // pred_check_branch
        %295 = sbr.rel (%p292) target = $region12
      $region11: #{tpu_custom_call.1} parent=5 // pred_region
        %s296 = ssub.s32 %s20, 1
        // Predicated region
        $region13: #{tpu_custom_call.1} parent=11 // pred_check
          %p297 = pneg %p67
        $region14: #{tpu_custom_call.1} parent=11 // pred_check_branch
          %299 = sbr.rel (%p297) target = $region16
        $region15: #{tpu_custom_call.1} parent=11 // pred_region
          _
        $region16: #{tpu_custom_call.1} parent=11 // pred_fallthru
          _
        // Predicated region
        $region17: #{tpu_custom_call.1} parent=11 // pred_check
          %p300 = pneg %p88
        $region18: #{tpu_custom_call.1} parent=11 // pred_check_branch
          %302 = sbr.rel (%p300) target = $region20
        $region19: #{tpu_custom_call.1} parent=11 // pred_region
          _
        $region20: #{tpu_custom_call.1} parent=11 // pred_fallthru
          _
        // Predicated region
        $region21: #{tpu_custom_call.1} parent=11 // pred_check
          %p303 = pneg %p109
        $region22: #{tpu_custom_call.1} parent=11 // pred_check_branch
          %305 = sbr.rel (%p303) target = $region24
        $region23: #{tpu_custom_call.1} parent=11 // pred_region
          _
        $region24: #{tpu_custom_call.1} parent=11 // pred_fallthru
          _
        // Predicated region
        $region25: #{tpu_custom_call.1} parent=11 // pred_check
          %p306 = pneg %p130
        $region26: #{tpu_custom_call.1} parent=11 // pred_check_branch
          %308 = sbr.rel (%p306) target = $region28
        $region27: #{tpu_custom_call.1} parent=11 // pred_region
          _
        $region28: #{tpu_custom_call.1} parent=11 // pred_fallthru
          _
        // Predicated region
        $region29: #{tpu_custom_call.1} parent=11 // pred_check
          %p309 = pneg %p151
        $region30: #{tpu_custom_call.1} parent=11 // pred_check_branch
          %311 = sbr.rel (%p309) target = $region32
        $region31: #{tpu_custom_call.1} parent=11 // pred_region
          _
        $region32: #{tpu_custom_call.1} parent=11 // pred_fallthru
          _
        // Predicated region
        $region33: #{tpu_custom_call.1} parent=11 // pred_check
          %p312 = pneg %p172
        $region34: #{tpu_custom_call.1} parent=11 // pred_check_branch
          %314 = sbr.rel (%p312) target = $region36
        $region35: #{tpu_custom_call.1} parent=11 // pred_region
          _
        $region36: #{tpu_custom_call.1} parent=11 // pred_fallthru
          _
        // Predicated region
        $region37: #{tpu_custom_call.1} parent=11 // pred_check
          %p315 = pneg %p193
        $region38: #{tpu_custom_call.1} parent=11 // pred_check_branch
          %317 = sbr.rel (%p315) target = $region40
        $region39: #{tpu_custom_call.1} parent=11 // pred_region
          _
        $region40: #{tpu_custom_call.1} parent=11 // pred_fallthru
          _
        // Predicated region
        $region41: #{tpu_custom_call.1} parent=11 // pred_check
          %p318 = pneg %p214
        $region42: #{tpu_custom_call.1} parent=11 // pred_check_branch
          %320 = sbr.rel (%p318) target = $region44
        $region43: #{tpu_custom_call.1} parent=11 // pred_region
          _
        $region44: #{tpu_custom_call.1} parent=11 // pred_fallthru
          _
        // Predicated region
        $region45: #{tpu_custom_call.1} parent=11 // pred_check
          %p321 = pneg %p235
        $region46: #{tpu_custom_call.1} parent=11 // pred_check_branch
          %323 = sbr.rel (%p321) target = $region48
        $region47: #{tpu_custom_call.1} parent=11 // pred_region
          _
        $region48: #{tpu_custom_call.1} parent=11 // pred_fallthru
          _
        // Predicated region
        $region49: #{tpu_custom_call.1} parent=11 // pred_check
          %p324 = pneg %p256
        $region50: #{tpu_custom_call.1} parent=11 // pred_check_branch
          %326 = sbr.rel (%p324) target = $region52
        $region51: #{tpu_custom_call.1} parent=11 // pred_region
          _
        $region52: #{tpu_custom_call.1} parent=11 // pred_fallthru
          _
      $region12: #{tpu_custom_call.1} parent=5 // pred_fallthru
        _
      %p327 = scmp.lt.s32.totalorder %s20, 2
      // Predicated region
      $region53: #{tpu_custom_call.1} parent=5 // pred_check
        %p328 = pneg %p327
      $region54: #{tpu_custom_call.1} parent=5 // pred_check_branch
        %330 = sbr.rel (%p328) target = $region56
      $region55: #{tpu_custom_call.1} parent=5 // pred_region
        // Predicated region
        $region57: #{tpu_custom_call.1} parent=55 // pred_check
          %p331 = pneg %p40
        $region58: #{tpu_custom_call.1} parent=55 // pred_check_branch
          %333 = sbr.rel (%p331) target = $region60
        $region59: #{tpu_custom_call.1} parent=55 // pred_region
          %s334 = smul.u32 2, %s20
          %p335 = scmp.lt.s32.totalorder %s334, 3
          %s336 = scalar_select %p335, %s334, 3
          %s337 = smul.addr %s336, 4
          %s338 = smul.addr %s337, 8
          %s339 = scalar_lea.vmem %s0, %s338
          %s340 = smul.u32 2, %s20
        $region60: #{tpu_custom_call.1} parent=55 // pred_fallthru
          _
      $region56: #{tpu_custom_call.1} parent=5 // pred_fallthru
        _
      %p341 = scmp.le.s32.totalorder 1, %s20
      %p342 = scmp.lt.s32.totalorder %s20, 3
      %p343 = pnand %p341, %p342
      %p344 = pneg %p343
      // Predicated region
      $region61: #{tpu_custom_call.1} parent=5 // pred_check
        _
      $region62: #{tpu_custom_call.1} parent=5 // pred_check_branch
        %346 = sbr.rel (%p343) target = $region64
      $region63: #{tpu_custom_call.1} parent=5 // pred_region
        %s347 = ssub.s32 %s20, 1
        %s348 = smul.u32 2, %s25
        %p349 = scmp.lt.s32.totalorder %s348, 3
        %s350 = scalar_select %p349, %s348, 3
        %s351 = smul.addr %s350, 4
        %s352 = smul.addr %s351, 8
        %s353 = scalar_lea.vmem %s0, %s352
        %p354 = pneg %p46
        %p355 = pneg %p43
        %p356 = pneg %p67
        %p357 = pneg %p64
        %p358 = pneg %p88
        %p359 = pneg %p85
        %p360 = pneg %p109
        %p361 = pneg %p106
        %p362 = pneg %p130
        %p363 = pneg %p127
        %p364 = pneg %p151
        %p365 = pneg %p148
        %p366 = pneg %p172
        %p367 = pneg %p169
        %p368 = pneg %p193
        %p369 = pneg %p190
        %p370 = pneg %p214
        %p371 = pneg %p211
        %p372 = pneg %p235
        %p373 = pneg %p232
        %p374 = pneg %p256
        %p375 = pneg %p253
        %p376 = pneg %p282
        %p377 = pneg %p279
        %s378 = sand.u32 %s269, 1
        %s379 = scalar_lea.sflag [#allocation3], %s378
        %s380 = sand.u32 %s269, 1
        %s381 = smul.addr %s380, 4
        %s382 = scalar_lea.vmem [#allocation2], %s381
        %s383 = smul.u32 2, %s25
        %p384 = scmp.lt.s32.totalorder %s383, 3
        %s385 = scalar_select %p384, %s383, 3
        %s386 = smul.addr %s385, 4
        %s387 = smul.addr %s386, 8
        %s388 = scalar_lea.vmem %s0, %s387
        %s389 = smul.u32 2, %s25
        %s390 = smul.u32 2, %s25
        %v391 = vld [vmem:[%s1] sm:$0xf]
        %v392 = vld [vmem:[%s2] sm:$0xf]
        %v393 = vld [vmem:[%s3] sm:$0xf]
        %v394 = vld [vmem:[%s4] sm:$0xf]
        %v395 = vld [vmem:[%s5] sm:$0xf]
        %v396 = vld [vmem:[%s6] sm:$0xf]
        %v397 = vld [vmem:[%s7] sm:$0xf]
        %v398 = vld [vmem:[%s8] sm:$0xf]
        %v399 = vld [vmem:[%s9] sm:$0x3]
        %v400 = vld [vmem:[%s10] sm:$0x3]
        %v401 = vld [vmem:[%s388] sm:$0xff]
        %v402 = vld [vmem:[%s388 + $0x8] sm:$0xff]
        %v403 = vld [vmem:[%s388 + $0x10] sm:$0xff]
        %v404 = vld [vmem:[%s388 + $0x18] sm:$0xff]
        %406 = vset.pattern.permute.xlu0 0
        %407 = vperm.xlu0 %406, %v393
        %v408 = vpop.permute.xlu0 %407
        %vm410 = vcmask 261120
        %v412 = vsel %vm410, %v391, 0
        %414 = vmatpush.msra.mxu0 0.0
        %415 = vmatpush.msra.mxu0 0.0
        %416 = vmatpush.msra.mxu0 0.0
        %417 = vmatpush.msra.mxu0 0.0
        %418 = vmatpush.msra.mxu0 0.0
        %419 = vmatpush.msra.mxu0 0.0
        %420 = vmatpush.msra.mxu0 0.0
        %421 = vmatpush.msra.mxu0 0.0
        %422 = vmatpush.msra.mxu0 0.0
        %423 = vmatpush.msra.mxu0 0.0
        %424 = vmatpush.msra.mxu0 0.0
        %425 = vmatpush.msra.mxu0 0.0
        %426 = vmatpush.msra.mxu0 %v404
        %427 = vmatpush.msra.mxu0 %v403
        %428 = vmatpush.msra.mxu0 %v402
        %429 = vmatpush.msra.mxu0 %v401
        %430 = vmatmul.f32.gmra.mxu0 %v412
        %v431 = vpop.f32.mrf.mxu0
        %v432 = vadd.f32 %v408, %v431
        %433 = vdwg.mxu0
        %435 = vset.pattern.permute.xlu0 0
        %436 = vperm.xlu0 %435, %v394
        %v437 = vpop.permute.xlu0 %436
        %v440 = vsel %vm410, %v392, 0
        %442 = vmatpush.msra.mxu0 0.0
        %443 = vmatpush.msra.mxu0 0.0
        %444 = vmatpush.msra.mxu0 0.0
        %445 = vmatpush.msra.mxu0 0.0
        %446 = vmatpush.msra.mxu0 0.0
        %447 = vmatpush.msra.mxu0 0.0
        %448 = vmatpush.msra.mxu0 0.0
        %449 = vmatpush.msra.mxu0 0.0
        %450 = vmatpush.msra.mxu0 0.0
        %451 = vmatpush.msra.mxu0 0.0
        %452 = vmatpush.msra.mxu0 0.0
        %453 = vmatpush.msra.mxu0 0.0
        %454 = vmatpush.msra.mxu0 %v404
        %455 = vmatpush.msra.mxu0 %v403
        %456 = vmatpush.msra.mxu0 %v402
        %457 = vmatpush.msra.mxu0 %v401
        %458 = vmatmul.f32.gmra.mxu0 %v440
        %v459 = vpop.f32.mrf.mxu0
        %v460 = vadd.f32 %v437, %v459
        %461 = vdwg.mxu0
        %v462 = vxor.u32 %v460, 2147483648
        %v463 = vmul.f32 %v462, 1.442695
        %v464 = vpow.pop %v463
        %v465 = vadd.f32 %v464, 1.0
        %v466 = vrcp.pop %v465
        %v467 = vmul.f32 %v465, %v466
        %v468 = vsub.f32 1.0, %v467
        %v469 = vmul.f32 %v466, %v468
        %v470 = vadd.f32 %v466, %v469
        %vm471 = vweird.f32 %v465
        %vm472 = vweird.f32 %v466
        %vm473 = vmor %vm471, %vm472
        %v474 = vsel %vm473, %v466, %v470
        %v475 = vand.u32 2147483647, %v465
        %vm476 = vcmp.eq.f32.partialorder %v475, 8.507059e+37
        %v477 = vand.u32 %v465, 2147483648
        %v478 = vor.u32 1.1754944e-38, %v477
        %v479 = vsel %vm476, %v478, %v474
        %v480 = vmul.f32 1.0, %v479
        %v481 = vmul.f32 %v432, %v480
        %vm482 = vcmask 125952
        %v483 = vsel %vm482, %v481, 0.0
        %484 = vadd.xlane.f32.xlu0 %v483
        %v485 = vpop.xlane.xlu0 %484
        %v486 = vrot.slane %v485, 4
        %v487 = vadd.f32 %v485, %v486
        %v488 = vrot.slane %v487, 2
        %v489 = vadd.f32 %v487, %v488
        %v490 = vrot.slane %v489, 1
        %v491 = vadd.f32 %v489, %v490
        %s492 = vtos %v491
        %v493 = vmul.f32 %v481, %v481
        %v494 = vsel %vm482, %v493, 0.0
        %495 = vadd.xlane.f32.xlu0 %v494
        %v496 = vpop.xlane.xlu0 %495
        %v497 = vrot.slane %v496, 4
        %v498 = vadd.f32 %v496, %v497
        %v499 = vrot.slane %v498, 2
        %v500 = vadd.f32 %v498, %v499
        %v501 = vrot.slane %v500, 1
        %v502 = vadd.f32 %v500, %v501
        %s503 = vtos %v502
        %s504 = smul.f32 %s492, 0.015625
        %s505 = smul.f32 %s503, 0.015625
        %s506 = smul.f32 %s504, %s504
        %s507 = ssub.f32 %s505, %s506
        %v508 = vstv %s504
        %v509 = vsub.f32 %v481, %v508
        %s510 = sadd.f32 %s507, 1e-05
        %v511 = vstv %s510
        %v512 = vrsqrt.pop %v511
        %v513 = vmul.f32 %v512, %v511
        %v514 = vmul.f32 %v513, %v512
        %v515 = vmul.f32 0.5, %v514
        %v516 = vsub.f32 1.5, %v515
        %v517 = vmul.f32 %v512, %v516
        %vm518 = vweird.f32 %v511
        %vm519 = vweird.f32 %v512
        %vm520 = vmor %vm518, %vm519
        %v521 = vsel %vm520, %v512, %v517
        %s522 = vtos %v521
        %v523 = vstv %s522
        %v524 = vmul.f32 %v509, %v523
        %v525 = vmul.f32 %v524, %v395
        %v526 = vadd.f32 %v525, %v396
        %528 = vset.pattern.permute.xlu0 0
        %529 = vperm.xlu0 %528, %v398
        %v530 = vpop.permute.xlu0 %529
        %vm532 = vcmask 31744
        %v534 = vsel %vm532, %v397, 0
        %vm536 = vcmask 1043456
        %v538 = vsel %vm536, %v526, 0
        %540 = vmatpush.msra.mxu0 0.0
        %541 = vmatpush.msra.mxu0 0.0
        %542 = vmatpush.msra.mxu0 0.0
        %543 = vmatpush.msra.mxu0 0.0
        %544 = vmatpush.msra.mxu0 0.0
        %545 = vmatpush.msra.mxu0 0.0
        %546 = vmatpush.msra.mxu0 0.0
        %547 = vmatpush.msra.mxu0 0.0
        %548 = vmatpush.msra.mxu0 0.0
        %549 = vmatpush.msra.mxu0 0.0
        %550 = vmatpush.msra.mxu0 0.0
        %551 = vmatpush.msra.mxu0 0.0
        %552 = vmatpush.msra.mxu0 0.0
        %553 = vmatpush.msra.mxu0 0.0
        %554 = vmatpush.msra.mxu0 0.0
        %555 = vmatpush.msra.mxu0 %v538
        %556 = vmatmul.f32.gmra.mxu0 %v534
        %v557 = vpop.f32.mrf.mxu0
        %v558 = vadd.f32 %v530, %v557
        %559 = vdwg.mxu0
        %v560 = vxor.u32 %v558, 2147483648
        %v561 = vmul.f32 %v560, 1.442695
        %v562 = vpow.pop %v561
        %v563 = vadd.f32 %v562, 1.0
        %v564 = vrcp.pop %v563
        %v565 = vmul.f32 %v563, %v564
        %v566 = vsub.f32 1.0, %v565
        %v567 = vmul.f32 %v564, %v566
        %v568 = vadd.f32 %v564, %v567
        %vm569 = vweird.f32 %v563
        %vm570 = vweird.f32 %v564
        %vm571 = vmor %vm569, %vm570
        %v572 = vsel %vm571, %v564, %v568
        %v573 = vand.u32 2147483647, %v563
        %vm574 = vcmp.eq.f32.partialorder %v573, 8.507059e+37
        %v575 = vand.u32 %v563, 2147483648
        %v576 = vor.u32 1.1754944e-38, %v575
        %v577 = vsel %vm574, %v576, %v572
        %v578 = vmul.f32 1.0, %v577
        %580 = vset.pattern.permute.xlu0 0
        %581 = vperm.xlu0 %580, %v400
        %v582 = vpop.permute.xlu0 %581
        %v585 = vsel %vm532, %v399, 0
        %v588 = vsel %vm536, %v578, 0
        %590 = vmatpush.msra.mxu0 0.0
        %591 = vmatpush.msra.mxu0 0.0
        %592 = vmatpush.msra.mxu0 0.0
        %593 = vmatpush.msra.mxu0 0.0
        %594 = vmatpush.msra.mxu0 0.0
        %595 = vmatpush.msra.mxu0 0.0
        %596 = vmatpush.msra.mxu0 0.0
        %597 = vmatpush.msra.mxu0 0.0
        %598 = vmatpush.msra.mxu0 0.0
        %599 = vmatpush.msra.mxu0 0.0
        %600 = vmatpush.msra.mxu0 0.0
        %601 = vmatpush.msra.mxu0 0.0
        %602 = vmatpush.msra.mxu0 0.0
        %603 = vmatpush.msra.mxu0 0.0
        %604 = vmatpush.msra.mxu0 0.0
        %605 = vmatpush.msra.mxu0 %v588
        %606 = vmatmul.f32.gmra.mxu0 %v585
        %v607 = vpop.f32.mrf.mxu0
        %v608 = vadd.f32 %v582, %v607
        %609 = vdwg.mxu0
        %vm610 = vcmask 123904
        %611 = vst.msk [vmem:[%s382] sm:$0x3] %vm610, %v608
        %s612 = scalar_lea.vmem %s388, 32
        %v613 = vld [vmem:[%s612] sm:$0xff]
        %v614 = vld [vmem:[%s612 + $0x8] sm:$0xff]
        %v615 = vld [vmem:[%s612 + $0x10] sm:$0xff]
        %v616 = vld [vmem:[%s612 + $0x18] sm:$0xff]
        %617 = vmatpush.msra.mxu0 0.0
        %618 = vmatpush.msra.mxu0 0.0
        %619 = vmatpush.msra.mxu0 0.0
        %620 = vmatpush.msra.mxu0 0.0
        %621 = vmatpush.msra.mxu0 0.0
        %622 = vmatpush.msra.mxu0 0.0
        %623 = vmatpush.msra.mxu0 0.0
        %624 = vmatpush.msra.mxu0 0.0
        %625 = vmatpush.msra.mxu0 0.0
        %626 = vmatpush.msra.mxu0 0.0
        %627 = vmatpush.msra.mxu0 0.0
        %628 = vmatpush.msra.mxu0 0.0
        %629 = vmatpush.msra.mxu0 %v616
        %630 = vmatpush.msra.mxu0 %v615
        %631 = vmatpush.msra.mxu0 %v614
        %632 = vmatpush.msra.mxu0 %v613
        %633 = vmatmul.f32.gmra.mxu0 %v412
        %v634 = vpop.f32.mrf.mxu0
        %v635 = vadd.f32 %v408, %v634
        %636 = vdwg.mxu0
        %637 = vmatpush.msra.mxu0 0.0
        %638 = vmatpush.msra.mxu0 0.0
        %639 = vmatpush.msra.mxu0 0.0
        %640 = vmatpush.msra.mxu0 0.0
        %641 = vmatpush.msra.mxu0 0.0
        %642 = vmatpush.msra.mxu0 0.0
        %643 = vmatpush.msra.mxu0 0.0
        %644 = vmatpush.msra.mxu0 0.0
        %645 = vmatpush.msra.mxu0 0.0
        %646 = vmatpush.msra.mxu0 0.0
        %647 = vmatpush.msra.mxu0 0.0
        %648 = vmatpush.msra.mxu0 0.0
        %649 = vmatpush.msra.mxu0 %v616
        %650 = vmatpush.msra.mxu0 %v615
        %651 = vmatpush.msra.mxu0 %v614
        %652 = vmatpush.msra.mxu0 %v613
        %653 = vmatmul.f32.gmra.mxu0 %v440
        %v654 = vpop.f32.mrf.mxu0
        %v655 = vadd.f32 %v437, %v654
        %656 = vdwg.mxu0
        %v657 = vxor.u32 %v655, 2147483648
        %v658 = vmul.f32 %v657, 1.442695
        %v659 = vpow.pop %v658
        %v660 = vadd.f32 %v659, 1.0
        %v661 = vrcp.pop %v660
        %v662 = vmul.f32 %v660, %v661
        %v663 = vsub.f32 1.0, %v662
        %v664 = vmul.f32 %v661, %v663
        %v665 = vadd.f32 %v661, %v664
        %vm666 = vweird.f32 %v660
        %vm667 = vweird.f32 %v661
        %vm668 = vmor %vm666, %vm667
        %v669 = vsel %vm668, %v661, %v665
        %v670 = vand.u32 2147483647, %v660
        %vm671 = vcmp.eq.f32.partialorder %v670, 8.507059e+37
        %v672 = vand.u32 %v660, 2147483648
        %v673 = vor.u32 1.1754944e-38, %v672
        %v674 = vsel %vm671, %v673, %v669
        %v675 = vmul.f32 1.0, %v674
        %v676 = vmul.f32 %v635, %v675
        %v677 = vsel %vm482, %v676, 0.0
        %678 = vadd.xlane.f32.xlu0 %v677
        %v679 = vpop.xlane.xlu0 %678
        %v680 = vrot.slane %v679, 4
        %v681 = vadd.f32 %v679, %v680
        %v682 = vrot.slane %v681, 2
        %v683 = vadd.f32 %v681, %v682
        %v684 = vrot.slane %v683, 1
        %v685 = vadd.f32 %v683, %v684
        %s686 = vtos %v685
        %v687 = vmul.f32 %v676, %v676
        %v688 = vsel %vm482, %v687, 0.0
        %689 = vadd.xlane.f32.xlu0 %v688
        %v690 = vpop.xlane.xlu0 %689
        %v691 = vrot.slane %v690, 4
        %v692 = vadd.f32 %v690, %v691
        %v693 = vrot.slane %v692, 2
        %v694 = vadd.f32 %v692, %v693
        %v695 = vrot.slane %v694, 1
        %v696 = vadd.f32 %v694, %v695
        %s697 = vtos %v696
        %s698 = smul.f32 %s686, 0.015625
        %s699 = smul.f32 %s697, 0.015625
        %s700 = smul.f32 %s698, %s698
        %s701 = ssub.f32 %s699, %s700
        %v702 = vstv %s698
        %v703 = vsub.f32 %v676, %v702
        %s704 = sadd.f32 %s701, 1e-05
        %v705 = vstv %s704
        %v706 = vrsqrt.pop %v705
        %v707 = vmul.f32 %v706, %v705
        %v708 = vmul.f32 %v707, %v706
        %v709 = vmul.f32 0.5, %v708
        %v710 = vsub.f32 1.5, %v709
        %v711 = vmul.f32 %v706, %v710
        %vm712 = vweird.f32 %v705
        %vm713 = vweird.f32 %v706
        %vm714 = vmor %vm712, %vm713
        %v715 = vsel %vm714, %v706, %v711
        %s716 = vtos %v715
        %v717 = vstv %s716
        %v718 = vmul.f32 %v703, %v717
        %v719 = vmul.f32 %v718, %v395
        %v720 = vadd.f32 %v719, %v396
        %v722 = vsel %vm536, %v720, 0
        %724 = vmatpush.msra.mxu0 0.0
        %725 = vmatpush.msra.mxu0 0.0
        %726 = vmatpush.msra.mxu0 0.0
        %727 = vmatpush.msra.mxu0 0.0
        %728 = vmatpush.msra.mxu0 0.0
        %729 = vmatpush.msra.mxu0 0.0
        %730 = vmatpush.msra.mxu0 0.0
        %731 = vmatpush.msra.mxu0 0.0
        %732 = vmatpush.msra.mxu0 0.0
        %733 = vmatpush.msra.mxu0 0.0
        %734 = vmatpush.msra.mxu0 0.0
        %735 = vmatpush.msra.mxu0 0.0
        %736 = vmatpush.msra.mxu0 0.0
        %737 = vmatpush.msra.mxu0 0.0
        %738 = vmatpush.msra.mxu0 0.0
        %739 = vmatpush.msra.mxu0 %v722
        %740 = vmatmul.f32.gmra.mxu0 %v534
        %v741 = vpop.f32.mrf.mxu0
        %v742 = vadd.f32 %v530, %v741
        %743 = vdwg.mxu0
        %v744 = vxor.u32 %v742, 2147483648
        %v745 = vmul.f32 %v744, 1.442695
        %v746 = vpow.pop %v745
        %v747 = vadd.f32 %v746, 1.0
        %v748 = vrcp.pop %v747
        %v749 = vmul.f32 %v747, %v748
        %v750 = vsub.f32 1.0, %v749
        %v751 = vmul.f32 %v748, %v750
        %v752 = vadd.f32 %v748, %v751
        %vm753 = vweird.f32 %v747
        %vm754 = vweird.f32 %v748
        %vm755 = vmor %vm753, %vm754
        %v756 = vsel %vm755, %v748, %v752
        %v757 = vand.u32 2147483647, %v747
        %vm758 = vcmp.eq.f32.partialorder %v757, 8.507059e+37
        %v759 = vand.u32 %v747, 2147483648
        %v760 = vor.u32 1.1754944e-38, %v759
        %v761 = vsel %vm758, %v760, %v756
        %v762 = vmul.f32 1.0, %v761
        %v764 = vsel %vm536, %v762, 0
        %766 = vmatpush.msra.mxu0 0.0
        %767 = vmatpush.msra.mxu0 0.0
        %768 = vmatpush.msra.mxu0 0.0
        %769 = vmatpush.msra.mxu0 0.0
        %770 = vmatpush.msra.mxu0 0.0
        %771 = vmatpush.msra.mxu0 0.0
        %772 = vmatpush.msra.mxu0 0.0
        %773 = vmatpush.msra.mxu0 0.0
        %774 = vmatpush.msra.mxu0 0.0
        %775 = vmatpush.msra.mxu0 0.0
        %776 = vmatpush.msra.mxu0 0.0
        %777 = vmatpush.msra.mxu0 0.0
        %778 = vmatpush.msra.mxu0 0.0
        %779 = vmatpush.msra.mxu0 0.0
        %780 = vmatpush.msra.mxu0 0.0
        %781 = vmatpush.msra.mxu0 %v764
        %782 = vmatmul.f32.gmra.mxu0 %v585
        %v783 = vpop.f32.mrf.mxu0
        %v784 = vadd.f32 %v582, %v783
        %785 = vdwg.mxu0
        %s786 = scalar_lea.vmem %s382, 2 [#allocation2]
        %787 = vst.msk [vmem:[%s786] sm:$0x3] %vm610, %v784
        %s788 = sand.u32 %s269, 1
        %s789 = scalar_lea.sflag [#allocation3], %s788
        %s790 = sand.u32 %s269, 1
        %s791 = smul.addr %s790, 4
        %s792 = scalar_lea.vmem [#allocation2], %s791
        // Predicated region
        $region65: #{tpu_custom_call.1} parent=63 // pred_check
          %p793 = pneg %p279
        $region66: #{tpu_custom_call.1} parent=63 // pred_check_branch
          %795 = sbr.rel (%p793) target = $region68
        $region67: #{tpu_custom_call.1} parent=63 // pred_region
          %s796 = smul.u32 2, %s25
          %798 = vsyncadd %s789, 0
          %s799 = smul.addr %s796, 2
          %s800 = scalar_lea.hbm %s11, %s799
          %s801 = sshll.u32 %s792, 4
          %s802 = int_to_ptr.vmem [resolvable:$true] %s801
          %s803 = sshll.u32 %s800, 4
          %s804 = int_to_ptr.hbm [resolvable:$true] %s803
          %809 = dma.vmem_to_hbm [thread:$0]  %s802, 64, %s804, %s789, 32, 32, 2
        $region68: #{tpu_custom_call.1} parent=63 // pred_fallthru
          _
      $region64: #{tpu_custom_call.1} parent=5 // pred_fallthru
        _
      %p810 = scmp.le.s32.totalorder 2, %s20
      // Predicated region
      $region69: #{tpu_custom_call.1} parent=5 // pred_check
        %p811 = pneg %p810
      $region70: #{tpu_custom_call.1} parent=5 // pred_check_branch
        %813 = sbr.rel (%p811) target = $region72
      $region71: #{tpu_custom_call.1} parent=5 // pred_region
        %s814 = ssub.s32 %s20, 2
        // Predicated region
        $region73: #{tpu_custom_call.1} parent=71 // pred_check
          %p815 = pneg %p285
        $region74: #{tpu_custom_call.1} parent=71 // pred_check_branch
          %817 = sbr.rel (%p815) target = $region76
        $region75: #{tpu_custom_call.1} parent=71 // pred_region
          %s818 = sand.u32 %s270, 1
          %s819 = scalar_lea.sflag [#allocation3], %s818
          %s820 = sand.u32 %s270, 1
          %s821 = smul.addr %s820, 4
          %s822 = scalar_lea.vmem [#allocation2], %s821
          %824 = dma.done %s819, 64
        $region76: #{tpu_custom_call.1} parent=71 // pred_fallthru
          _
      $region72: #{tpu_custom_call.1} parent=5 // pred_fallthru
        _
    $region6: #{tpu_custom_call.1} parent=1 // loop_footer
      %s24 = sadd.s32 1, %s20
    $region7: #{tpu_custom_call.1} parent=1 // loop_footer_branch
      %19 = sbr.rel target = $region3
    $region8: #{tpu_custom_call.1} parent=1 // loop_exit
      _
    %825 = vsyncpa [#allocation3], 1
    %s826 = scalar_lea.sflag [#allocation3], 1
    %827 = vsyncpa %s826, 1

</llo_original>
